<compile_context>
chip_gen: v5e
topology: v5e:2x2
jax: 0.10.0
libtpu: 0.0.40
codegen_flags: <defaults>
</compile_context>

<pallas_src>
import functools
import numpy as np

import jax
import jax.numpy as jnp
from jax import lax
from jax.experimental import pallas as pl
from jax.experimental.pallas import tpu as pltpu

_MASK_VALUE = -1e30          # finite "-inf": no NaN even for fully-masked rows
_VMEM_LIMIT = 64 * 1024 * 1024   # fits v7x (64 MiB) as well as v5e/v6e (128 MiB)


def _pick_tile(n, target):
    """Largest tile <= target that evenly divides n and is a multiple of 8,
    falling back to the full extent (which always satisfies the layout rule)."""
    if n <= target:
        return n
    t = (min(n, target) // 8) * 8
    while t >= 8:
        if n % t == 0:
            return t
        t -= 8
    return n


# ----------------------------------------------------------------------------
# Kernel 1 / 3: plain row-tiled matmul (QKV projection), bf16 MXU inputs.
# ----------------------------------------------------------------------------
def _matmul_kernel(x_ref, w_ref, o_ref):
    x = x_ref[...].astype(jnp.bfloat16)          # (tm, C)
    o_ref[...] = jnp.dot(x, w_ref[...],          # (C, N) bf16, pre-transposed
                         preferred_element_type=jnp.float32).astype(o_ref.dtype)


# ----------------------------------------------------------------------------
# Kernel 3 / 3: row-tiled matmul + bias (output projection).
# ----------------------------------------------------------------------------
def _matmul_bias_kernel(x_ref, w_ref, b_ref, o_ref):
    x = x_ref[...].astype(jnp.bfloat16)          # (tm, C)
    acc = jnp.dot(x, w_ref[...], preferred_element_type=jnp.float32)
    o_ref[...] = (acc + b_ref[...]).astype(o_ref.dtype)   # bias (1, C) f32


# ----------------------------------------------------------------------------
# Kernel 2 / 3: causal flash attention with online softmax.
#   grid = (B, H, num_q_tiles, num_kv_tiles)   (kv axis innermost, "arbitrary")
#   q_ref/k_ref/v_ref blocks: (tq, Dh) / (tk, Dh) bf16 (leading dims squeezed)
# ----------------------------------------------------------------------------
def _flash_attn_kernel(q_ref, k_ref, v_ref, o_ref, m_sc, l_sc, acc_sc):
    qi = pl.program_id(2)
    ki = pl.program_id(3)
    nk = pl.num_programs(3)

    tq = q_ref.shape[0]
    tk = k_ref.shape[0]
    q_start = qi * tq
    k_start = ki * tk

    @pl.when(ki == 0)
    def _init():
        m_sc[...] = jnp.full(m_sc.shape, _MASK_VALUE, jnp.float32)
        l_sc[...] = jnp.zeros(l_sc.shape, jnp.float32)
        acc_sc[...] = jnp.zeros(acc_sc.shape, jnp.float32)

    # Skip kv tiles that lie entirely above the causal diagonal
    # (first kv column index > last q row index)  -> ~halves MXU/VPU work.
    @pl.when(k_start < q_start + tq)
    def _compute():
        q = q_ref[...]                           # (tq, Dh) bf16 (scale folded in)
        k = k_ref[...]                           # (tk, Dh) bf16
        v = v_ref[...]                           # (tk, Dh) bf16

        # scores: contract over Dh without materializing k^T
        s = lax.dot_general(q, k, (((1,), (1,)), ((), ())),
                            preferred_element_type=jnp.float32)   # (tq, tk) f32

        # causal mask with global row/col indices (finite mask value)
        row_ids = q_start + lax.broadcasted_iota(jnp.int32, (tq, tk), 0)
        col_ids = k_start + lax.broadcasted_iota(jnp.int32, (tq, tk), 1)
        s = jnp.where(row_ids >= col_ids, s, _MASK_VALUE)

        m_prev = m_sc[...]                                        # (tq, 1)
        m_new = jnp.maximum(m_prev, jnp.max(s, axis=-1, keepdims=True))
        alpha = jnp.exp(m_prev - m_new)                           # (tq, 1)
        p = jnp.exp(s - m_new)                                    # (tq, tk) f32

        l_sc[...] = alpha * l_sc[...] + jnp.sum(p, axis=-1, keepdims=True)
        acc_sc[...] = alpha * acc_sc[...] + jnp.dot(
            p.astype(v.dtype), v, preferred_element_type=jnp.float32)
        m_sc[...] = m_new

    @pl.when(ki == nk - 1)
    def _finalize():
        inv_l = pl.reciprocal(l_sc[...], approx=True)             # EUP slot
        o_ref[...] = (acc_sc[...] * inv_l).astype(o_ref.dtype)


# ----------------------------------------------------------------------------
# Wrapper
# ----------------------------------------------------------------------------
def causal_self_attention(x, wqkv, wo, bo, *, n_head):
    """x: (B, T, C) f32.  wqkv: (3C, C), wo: (C, C), bo: (C,)  (torch Linear)."""
    B, T, C = x.shape
    H = n_head
    assert C % H == 0
    Dh = C // H
    scale = 1.0 / np.sqrt(Dh)

    # ---- one-time weight prep (equivalent to load-time prep in a real model)
    # pre-transpose so kernels do plain x @ W; fold 1/sqrt(Dh) into Q columns;
    # cast MXU operands to bf16 (f32 accumulation happens inside the kernels).
    col_scale = jnp.concatenate([jnp.full((C,), scale, jnp.float32),
                                 jnp.ones((2 * C,), jnp.float32)])
    wqkv_t = (wqkv.astype(jnp.float32).T * col_scale[None, :]).astype(jnp.bfloat16)
    wo_t = wo.astype(jnp.float32).T.astype(jnp.bfloat16)          # (C, C)
    bo2 = bo.reshape(1, C).astype(jnp.float32)

    x2 = x.reshape(B * T, C)                                      # fold (B, T)
    tm = _pick_tile(B * T, 256)

    # ---- 1) fused QKV projection: (B*T, C) @ (C, 3C) -> (B*T, 3C) bf16
    # NOTE: weights stay VMEM-resident across the grid (constant index_map);
    # for very large C they should be tiled along K / streamed in bf16.
    qkv_flat = pl.pallas_call(
        _matmul_kernel,
        out_shape=jax.ShapeDtypeStruct((B * T, 3 * C), jnp.bfloat16),
        grid_spec=pltpu.PrefetchScalarGridSpec(
            num_scalar_prefetch=0,
            grid=(B * T // tm,),
            in_specs=[
                pl.BlockSpec((tm, C), lambda m: (m, 0)),
                pl.BlockSpec((C, 3 * C), lambda m: (0, 0)),
            ],
            out_specs=pl.BlockSpec((tm, 3 * C), lambda m: (m, 0)),
        ),
        compiler_params=pltpu.CompilerParams(
            dimension_semantics=("parallel",),
            vmem_limit_bytes=_VMEM_LIMIT),
    )(x2, wqkv_t)

    # ---- head split: wrapper-side layout plumbing (no in-kernel transposes)
    qkv = qkv_flat.reshape(B, T, 3, H, Dh)
    q = jnp.transpose(qkv[:, :, 0], (0, 2, 1, 3))                 # (B, H, T, Dh)
    k = jnp.transpose(qkv[:, :, 1], (0, 2, 1, 3))
    v = jnp.transpose(qkv[:, :, 2], (0, 2, 1, 3))

    # ---- 2) causal flash attention
    tq = _pick_tile(T, 256)
    tk = _pick_tile(T, 256)
    nq, nk = T // tq, T // tk

    y = pl.pallas_call(
        _flash_attn_kernel,
        out_shape=jax.ShapeDtypeStruct((B, H, T, Dh), jnp.bfloat16),
        grid_spec=pltpu.PrefetchScalarGridSpec(
            num_scalar_prefetch=0,
            grid=(B, H, nq, nk),
            in_specs=[
                pl.BlockSpec((None, None, tq, Dh), lambda b, h, qi, ki: (b, h, qi, 0)),
                pl.BlockSpec((None, None, tk, Dh), lambda b, h, qi, ki: (b, h, ki, 0)),
                pl.BlockSpec((None, None, tk, Dh), lambda b, h, qi, ki: (b, h, ki, 0)),
            ],
            out_specs=pl.BlockSpec((None, None, tq, Dh),
                                   lambda b, h, qi, ki: (b, h, qi, 0)),
            scratch_shapes=[
                pltpu.VMEM((tq, 1), jnp.float32),    # running max  m
                pltpu.VMEM((tq, 1), jnp.float32),    # running sum  l
                pltpu.VMEM((tq, Dh), jnp.float32),   # accumulator
            ],
        ),
        compiler_params=pltpu.CompilerParams(
            dimension_semantics=("parallel", "parallel", "parallel", "arbitrary"),
            vmem_limit_bytes=_VMEM_LIMIT),
    )(q, k, v)

    # ---- head merge (wrapper layout plumbing) and 3) output projection
    y2 = jnp.transpose(y, (0, 2, 1, 3)).reshape(B * T, C)         # bf16

    out2 = pl.pallas_call(
        _matmul_bias_kernel,
        out_shape=jax.ShapeDtypeStruct((B * T, C), x.dtype),
        grid_spec=pltpu.PrefetchScalarGridSpec(
            num_scalar_prefetch=0,
            grid=(B * T // tm,),
            in_specs=[
                pl.BlockSpec((tm, C), lambda m: (m, 0)),
                pl.BlockSpec((C, C), lambda m: (0, 0)),
                pl.BlockSpec((1, C), lambda m: (0, 0)),
            ],
            out_specs=pl.BlockSpec((tm, C), lambda m: (m, 0)),
        ),
        compiler_params=pltpu.CompilerParams(
            dimension_semantics=("parallel",),
            vmem_limit_bytes=_VMEM_LIMIT),
    )(y2, wo_t, bo2)

    return out2.reshape(B, T, C)


# ----------------------------------------------------------------------------
# Pure-JAX f32 reference mirroring the torch forward (dropout as identity).
# ----------------------------------------------------------------------------
def _reference(x, wqkv, wo, bo, n_head):
    B, T, C = x.shape
    H, Dh = n_head, C // n_head
    qkv = x @ wqkv.T
    q, k, v = jnp.split(qkv, 3, axis=-1)
    q = q.reshape(B, T, H, Dh).transpose(0, 2, 1, 3)
    k = k.reshape(B, T, H, Dh).transpose(0, 2, 1, 3)
    v = v.reshape(B, T, H, Dh).transpose(0, 2, 1, 3)
    att = jnp.einsum('bhtd,bhsd->bhts', q, k) / np.sqrt(Dh)
    mask = jnp.tril(jnp.ones((T, T), dtype=bool))
    att = jnp.where(mask[None, None], att, -jnp.inf)
    att = jax.nn.softmax(att, axis=-1)
    y = jnp.einsum('bhts,bhsd->bhtd', att, v)
    y = y.transpose(0, 2, 1, 3).reshape(B, T, C)
    return y @ wo.T + bo


if __name__ == "__main__":
    # Small shapes consistent with the module: B=2, T(n_sequence)=8,
    # C(n_dim)=32, n_head=4 (head_dim=8).
    B, T, C, H = 2, 8, 32, 4

    key = jax.random.PRNGKey(0)
    kx, kqkv, kwo, kbo = jax.random.split(key, 4)
    x = jax.random.normal(kx, (B, T, C), dtype=jnp.float32)
    wqkv = 0.02 * jax.random.normal(kqkv, (3 * C, C), dtype=jnp.float32)
    wo = 0.02 * jax.random.normal(kwo, (C, C), dtype=jnp.float32)
    bo = 0.02 * jax.random.normal(kbo, (C,), dtype=jnp.float32)

    out = causal_self_attention(x, wqkv, wo, bo, n_head=H)
    out = jax.block_until_ready(out)

    ref = _reference(x, wqkv, wo, bo, H)
    # bf16 MXU inputs + approx reciprocal -> compare with loosened tolerance.
    np.testing.assert_allclose(np.asarray(out), np.asarray(ref),
                               rtol=2e-2, atol=5e-3)
    print("KERNEL_OK")
</pallas_src>

<mosaic_0001>
module attributes {stable_mosaic.version = 11 : i64} {
  func.func @_matmul_kernel(%arg0: i32, %arg1: memref<16x32xf32, #tpu.memory_space<vmem>>, %arg2: memref<32x96xbf16, #tpu.memory_space<vmem>>, %arg3: memref<16x96xbf16, #tpu.memory_space<vmem>>) attributes {dimension_semantics = [#tpu.dimension_semantics<parallel>], iteration_bounds = array<i64: 1>, scalar_prefetch = 0 : i64, scratch_operands = 0 : i64, tpu.core_type = #tpu.core_type<tc>, window_params = [{transform_indices = @transform_0, window_bounds = array<i64: 16, 32>}, {pipeline_mode = #tpu.pipeline_mode<synchronous>, transform_indices = @transform_1, window_bounds = array<i64: 32, 96>}, {transform_indices = @transform_2, window_bounds = array<i64: 16, 96>}]} {
    %c0 = arith.constant 0 : index
    %c0_0 = arith.constant 0 : index
    %0 = vector.load %arg1[%c0, %c0_0] : memref<16x32xf32, #tpu.memory_space<vmem>>, vector<16x32xf32>
    %1 = arith.truncf %0 : vector<16x32xf32> to vector<16x32xbf16>
    %c0_1 = arith.constant 0 : index
    %c0_2 = arith.constant 0 : index
    %2 = vector.load %arg2[%c0_1, %c0_2] : memref<32x96xbf16, #tpu.memory_space<vmem>>, vector<32x96xbf16>
    %cst = arith.constant dense<0.000000e+00> : vector<16x96xf32>
    %3 = tpu.matmul %1, %2, %cst {dimension_numbers = #tpu.dot_dimension_numbers<[1], [0], [0], [1], [0, 0, 1, 1], [], []>} : vector<16x32xbf16>, vector<32x96xbf16>, vector<16x96xf32> -> vector<16x96xf32>
    %4 = arith.truncf %3 : vector<16x96xf32> to vector<16x96xbf16>
    %c0_3 = arith.constant 0 : index
    %c0_4 = arith.constant 0 : index
    %5 = vector.load %arg3[%c0_3, %c0_4] : memref<16x96xbf16, #tpu.memory_space<vmem>>, vector<16x96xbf16>
    tpu.vector_store %arg3[%c0_3, %c0_4], %4 {strides = array<i32>} : memref<16x96xbf16, #tpu.memory_space<vmem>>, vector<16x96xbf16>,
    return
  }
  func.func @transform_0(%arg0: i32) -> (i32, i32) {
    %c0_i32 = arith.constant 0 : i32
    %c0_i32_0 = arith.constant 0 : i32
    return %arg0, %c0_i32 : i32, i32
  }
  func.func @transform_1(%arg0: i32) -> (i32, i32) {
    %c0_i32 = arith.constant 0 : i32
    %c0_i32_0 = arith.constant 0 : i32
    %c0_i32_1 = arith.constant 0 : i32
    return %c0_i32, %c0_i32_0 : i32, i32
  }
  func.func @transform_2(%arg0: i32) -> (i32, i32) {
    %c0_i32 = arith.constant 0 : i32
    %c0_i32_0 = arith.constant 0 : i32
    return %arg0, %c0_i32 : i32, i32
  }
}

</mosaic_0001>

<llo_original>
// kernel: tpu_custom_call.1
$region0: #{tpu_custom_call.1}
  #allocation0 [shape = 'u32[]', space=smem, size = 0x4, offset = 0x4, fixed_abs, tag = 'smem constant byte address 0x4 - core index']
  #allocation1 [shape = 'u32[72,128]{1,0:T(1,128)}', space=vmem, size = 0x9000, scoped, tag = 'internal scratch']
  %s0 = inlined_call_operand.hbm [shape: f32[16,32], index: 0, kind: input, shape index: {}]
  %s1 = inlined_call_operand.hbm [shape: bf16[32,96], index: 1, kind: input, shape index: {}]
  %s2 = inlined_call_operand.hbm [shape: bf16[16,96], index: 2, kind: output, shape index: {}]
  %s3 = sld [smem:[#allocation0]]
  $region26: #{tpu_custom_call.1} parent=0
    _
  %s5 = ssub.s32 1, %s3
  %s6 = scalar_select 0, %s5, %s3
  $region1: #{tpu_custom_call.1} parent=0
    #allocation2 [shape = 'u8[8192]{0}', space=vmem, size = 0x2000, scoped, tag = 'input window, operand 0, single buffered']
    #allocation3 [shape = 's32[1]{0}', space=sflag, size = 0x4, scoped, tag = 'scoped memory for tpu_custom_call.1']
    #allocation4 [shape = 's32[1]{0}', space=sflag, size = 0x4, scoped, tag = 'scoped memory for tpu_custom_call.1']
    #allocation5 [shape = 'u8[8192]{0}', space=vmem, size = 0x2000, scoped, tag = 'input window, operand 1, single buffered']
    #allocation6 [shape = 's32[1]{0}', space=sflag, size = 0x4, scoped, tag = 'scoped memory for tpu_custom_call.1']
    #allocation7 [shape = 'u8[4096]{0}', space=vmem, size = 0x1000, scoped, tag = 'output window, operand 0, single buffered']
    %7 = vsyncpa [#allocation3], 0
    %8 = vsyncpa [#allocation6], 0
    %9 = vsyncpa [#allocation4], 0
    // Predicated region
    $region2: #{tpu_custom_call.1} parent=1 // pred_check
      _
    $region3: #{tpu_custom_call.1} parent=1 // pred_check_branch
      %11 = sbr.rel (0) target = $region5
    $region4: #{tpu_custom_call.1} parent=1 // pred_region
      %13 = vsyncadd [#allocation3], 0
      %s14 = sshll.u32 %s0, 4
      %s15 = int_to_ptr.hbm [resolvable:$true] %s14
      %s16 = sshll.u32 [#allocation2], 4
      %s17 = int_to_ptr.vmem [resolvable:$true] %s16
      %22 = dma.hbm_to_vmem [thread:$0]  %s15, 256, %s17, [#allocation3], 128, 128, 8
    $region5: #{tpu_custom_call.1} parent=1 // pred_fallthru
      _
    // Predicated region
    $region6: #{tpu_custom_call.1} parent=1 // pred_check
      _
    $region7: #{tpu_custom_call.1} parent=1 // pred_check_branch
      %24 = sbr.rel (0) target = $region9
    $region8: #{tpu_custom_call.1} parent=1 // pred_region
      %26 = vsyncadd [#allocation6], 0
      %s27 = sshll.u32 %s1, 4
      %s28 = int_to_ptr.hbm [resolvable:$true] %s27
      %s29 = sshll.u32 [#allocation5], 4
      %s30 = int_to_ptr.vmem [resolvable:$true] %s29
      %35 = dma.hbm_to_vmem [thread:$0]  %s28, 256, %s30, [#allocation6], 64, 64, 4
    $region9: #{tpu_custom_call.1} parent=1 // pred_fallthru
      _
    // Predicated region
    $region10: #{tpu_custom_call.1} parent=1 // pred_check
      _
    $region11: #{tpu_custom_call.1} parent=1 // pred_check_branch
      %37 = sbr.rel (0) target = $region13
    $region12: #{tpu_custom_call.1} parent=1 // pred_region
      %39 = dma.done [#allocation3], 256
    $region13: #{tpu_custom_call.1} parent=1 // pred_fallthru
      _
    // Predicated region
    $region14: #{tpu_custom_call.1} parent=1 // pred_check
      _
    $region15: #{tpu_custom_call.1} parent=1 // pred_check_branch
      %41 = sbr.rel (0) target = $region17
    $region16: #{tpu_custom_call.1} parent=1 // pred_region
      %43 = dma.done [#allocation6], 256
    $region17: #{tpu_custom_call.1} parent=1 // pred_fallthru
      _
    %v45 = vld [vmem:[#allocation2] sm:$0xff]
    %v46 = vld [vmem:[#allocation2 + $0x8] sm:$0xff]
    %v47 = vpack.c.bf16 %v46, %v45
    %v48 = vld [vmem:[#allocation5] sm:$0xf]
    %v49 = vld [vmem:[#allocation5 + $0x4] sm:$0xf]
    %v50 = vld [vmem:[#allocation5 + $0x8] sm:$0xf]
    %v51 = vld [vmem:[#allocation5 + $0xc] sm:$0xf]
    %v56 = vunpack.c.l.b16 %v48
    %v57 = vunpack.c.l.b16 %v49
    %v58 = vunpack.c.l.b16 %v50
    %v59 = vunpack.c.l.b16 %v51
    %v60 = vpack.c.b16 %v57, %v56
    %v61 = vpack.c.b16 %v59, %v58
    %vm64 = vcmask 261120
    %v66 = vsel %vm64, %v47, 0
    %68 = vmatpush.bf16.msra.mxu0 0
    %69 = vmatpush.bf16.msra.mxu0 0
    %70 = vmatpush.bf16.msra.mxu0 0
    %71 = vmatpush.bf16.msra.mxu0 0
    %72 = vmatpush.bf16.msra.mxu0 0
    %73 = vmatpush.bf16.msra.mxu0 0
    %74 = vmatpush.bf16.msra.mxu0 %v61
    %75 = vmatpush.bf16.msra.mxu0 %v60
    %76 = vmatmul.bf16.gmra.mxu0 %v66
    %v77 = vpop.f32.mrf.mxu0
    %v78 = vadd.f32 0.0, %v77
    %v79 = vpop.f32.mrf.mxu0
    %v80 = vadd.f32 0.0, %v79
    %81 = vdwg.mxu0
    %v82 = vpack.c.bf16 %v78, %v78
    %v83 = vpack.c.bf16 %v80, %v80
    %vm84 = vcmask 781312
    %85 = vst.msk [vmem:[#allocation7] sm:$0xf] %vm84, %v82
    %86 = vst.msk [vmem:[#allocation7 + $0x4] sm:$0xf] %vm84, %v83
    // Predicated region
    $region18: #{tpu_custom_call.1} parent=1 // pred_check
      _
    $region19: #{tpu_custom_call.1} parent=1 // pred_check_branch
      %88 = sbr.rel (0) target = $region21
    $region20: #{tpu_custom_call.1} parent=1 // pred_region
      %90 = vsyncadd [#allocation4], 0
      %s91 = sshll.u32 [#allocation7], 4
      %s92 = int_to_ptr.vmem [resolvable:$true] %s91
      %s93 = sshll.u32 %s2, 4
      %s94 = int_to_ptr.hbm [resolvable:$true] %s93
      %99 = dma.vmem_to_hbm [thread:$0]  %s92, 128, %s94, [#allocation4], 64, 64, 4
    $region21: #{tpu_custom_call.1} parent=1 // pred_fallthru
      _
    // Predicated region
    $region22: #{tpu_custom_call.1} parent=1 // pred_check
      _
    $region23: #{tpu_custom_call.1} parent=1 // pred_check_branch
      %101 = sbr.rel (0) target = $region25
    $region24: #{tpu_custom_call.1} parent=1 // pred_region
      %103 = dma.done [#allocation4], 128
    $region25: #{tpu_custom_call.1} parent=1 // pred_fallthru
      _
    %104 = vsyncpa [#allocation3], 1
    %105 = vsyncpa [#allocation6], 1
    %106 = vsyncpa [#allocation4], 1

</llo_original>
